<compile_context>
chip_gen: v5e
topology: v5e:2x2
jax: 0.10.0
libtpu: 0.0.40
codegen_flags: <defaults>
</compile_context>

<pallas_src>
import functools
import math

import jax
import jax.numpy as jnp
from jax import lax
from jax.experimental import pallas as pl
from jax.experimental.pallas import tpu as pltpu


# ----------------------------------------------------------------------------
# Kernel
# ----------------------------------------------------------------------------
def _tce_kernel(p_ref, t_ref, acc_ref, *, lane_shift, rows_per_block, total_rows,
                steps, need_row_mask):
    """One (tr, L) block: threshold, compare, lane-shifted inequality, reduce."""
    c = pl.program_id(0)
    s = pl.program_id(1)

    @pl.when(s == 0)
    def _():
        acc_ref[...] = jnp.zeros_like(acc_ref)

    # Native-dtype loads; cast to f32 in-register (v5e has no bf16 VPU).
    pred_bin = (p_ref[...] > 0).astype(jnp.float32)
    tgt = t_ref[...].astype(jnp.float32)
    matches = (pred_bin == tgt).astype(jnp.float32)              # (tr, L) in {0,1}

    # Lane shift by C (lane_shift = L - C): pairs lane j with its temporal
    # neighbour.  Pixel-boundary / wrap pairs are masked out in the wrapper.
    shifted = pltpu.roll(matches, shift=lane_shift, axis=1)      # XLU slot
    changed = (matches != shifted).astype(jnp.float32)           # {0,1}, no abs/sub

    if need_row_mask:
        # cdiv grid: zero out rows past R (covers the partial last block and
        # any clamped duplicate steps on the second core).
        row0 = (c * steps + s) * rows_per_block
        rows = lax.broadcasted_iota(jnp.int32, changed.shape, 0) + row0
        changed = jnp.where(rows < total_rows, changed, 0.0)

    # (tr, L) -> (tr//8, 8, L): reduce across vreg groups only (plain VPU adds)
    # into the resident (1, 8, L) accumulator; the cross-sublane reduce is done
    # once in the wrapper, not per grid step.
    tr, lanes = changed.shape
    acc_ref[...] += jnp.sum(changed.reshape(tr // 8, 8, lanes), axis=0)[None]


# ----------------------------------------------------------------------------
# pltpu.roll rotation-convention probe: one tiny kernel, run at most once per
# process and cached as a Python bool (never re-executed inside traced calls).
# ----------------------------------------------------------------------------
def _roll_probe_kernel(x_ref, o_ref):
    o_ref[...] = pltpu.roll(x_ref[...], shift=1, axis=1)


_ROLL_MATCHES_JNP = None


def _roll_matches_jnp_roll():
    global _ROLL_MATCHES_JNP
    if _ROLL_MATCHES_JNP is None:
        x = jnp.arange(8 * 128, dtype=jnp.float32).reshape(8, 128)
        y = pl.pallas_call(
            _roll_probe_kernel,
            out_shape=jax.ShapeDtypeStruct((8, 128), jnp.float32),
        )(x)
        _ROLL_MATCHES_JNP = bool(jax.device_get(jnp.all(y == jnp.roll(x, 1, axis=1))))
    return _ROLL_MATCHES_JNP


# ----------------------------------------------------------------------------
# Host-side (static) hardware heuristics + tiling helpers
# ----------------------------------------------------------------------------
def _hw_params():
    """(num_cores, vmem_limit_bytes).  Heuristic only; correctness-neutral."""
    kind = ""
    try:
        kind = jax.devices()[0].device_kind.lower()
    except Exception:
        pass
    vmem_cap = None
    try:
        info = pltpu.get_tpu_info()
        vmem_cap = getattr(info, "vmem_capacity_bytes", None)
    except Exception:
        pass

    is_v7 = "v7" in kind
    # 2-TC split only where the chip actually has two TensorCores; single-TC
    # chips (v5e/v6e) keep num_cores=1 so the outer axis never costs anything.
    num_cores = 2 if (is_v7 or "v4" in kind or "v5p" in kind) else 1

    # v7x has 64 MiB VMEM per TC -> conservative budget; 128-MiB chips get the
    # large budget so per-step tiles reach the HBM-streaming roofline.
    big_vmem = (vmem_cap is not None) and (vmem_cap >= 100 * (1 << 20)) and not is_v7
    vmem_limit = (96 << 20) if big_vmem else (48 << 20)
    return num_cores, vmem_limit


def _pick_lane_factor(npix, unit, max_lanes=2048):
    """Largest k dividing npix with k*unit <= max_lanes, preferring 128-aligned L."""
    k_align = 128 // math.gcd(unit, 128)
    max_k = max(1, max_lanes // unit)
    best_aligned, best_any = 0, 1
    for k in range(1, max_k + 1):
        if npix % k:
            continue
        best_any = k
        if k % k_align == 0:
            best_aligned = k
    return best_aligned if best_aligned else best_any


def _pick_row_tile(num_rows, lanes, budget_bytes, per_elem_bytes):
    """Largest multiple-of-8 row tile fitting the VMEM budget (cdiv grid + mask
    handles any remainder, so no divisibility requirement)."""
    # TODO(synk): if a single pixel's T*C exceeds ~1M elements the minimum
    # 8-row block may not fit VMEM; lane tiling in multiples of unit would fix
    # that pathological case.
    max_elems = max(budget_bytes // per_elem_bytes, 8 * lanes)
    cap = max(8, (max_elems // lanes) // 8 * 8)
    needed = ((num_rows + 7) // 8) * 8
    return min(cap, needed)


# ----------------------------------------------------------------------------
# Wrapper
# ----------------------------------------------------------------------------
def temporal_consistency_score(pred, target):
    """pred, target: (B, H, W, T, C) arrays (any float/int dtype).  Returns f32 scalar.

    Narrow dtypes are honoured end-to-end: bf16 pred and/or int8/bool target
    halve HBM traffic for this bandwidth-bound metric.
    """
    assert pred.shape == target.shape, (pred.shape, target.shape)
    B, H, W, T, C = pred.shape
    if T < 2:
        return jnp.float32(0.0)

    unit = T * C                       # flat elements per (b, h, w) pixel
    npix = B * H * W

    k = _pick_lane_factor(npix, unit)
    L = k * unit
    R = npix // k

    num_cores, vmem_limit = _hw_params()

    # Per-element VMEM: double-buffered inputs + ~4 f32 block temporaries that
    # Mosaic materializes (matches / shifted / changed / mask-select).
    per_elem = 2 * (pred.dtype.itemsize + target.dtype.itemsize) + 16
    tr = _pick_row_tile(R, L, int(vmem_limit * 0.7), per_elem)

    nb = (R + tr - 1) // tr                       # total row blocks (cdiv)
    num_cores = max(1, min(num_cores, nb))
    steps = (nb + num_cores - 1) // num_cores
    need_row_mask = (num_cores * steps * tr != R)

    # Copy-free reshapes: (B,H,W,T,C) is already contiguous in this order.
    p2 = pred.reshape(R, L)
    t2 = target.reshape(R, L)

    def in_index_map(c, s):
        # Clamp so the (possibly) trailing steps of the last core re-read the
        # final block; their contribution is zeroed by the in-kernel row mask.
        return (jnp.minimum(c * steps + s, nb - 1), 0)

    kernel = functools.partial(
        _tce_kernel,
        lane_shift=L - C,
        rows_per_block=tr,
        total_rows=R,
        steps=steps,
        need_row_mask=need_row_mask,
    )

    acc = pl.pallas_call(
        kernel,
        out_shape=jax.ShapeDtypeStruct((num_cores, 8, L), jnp.float32),
        grid_spec=pltpu.PrefetchScalarGridSpec(
            num_scalar_prefetch=0,
            grid=(num_cores, steps),
            in_specs=[
                # Default double-buffering; blocks are multi-MiB so DMA is not
                # exposed.  (pl.Buffered(3) only if profiling shows otherwise.)
                pl.BlockSpec((tr, L), in_index_map),
                pl.BlockSpec((tr, L), in_index_map),
            ],
            # One resident (8, L) accumulator per core.
            out_specs=pl.BlockSpec((1, 8, L), lambda c, s: (c, 0, 0)),
        ),
        compiler_params=pltpu.CompilerParams(
            dimension_semantics=("parallel", "arbitrary"),
            vmem_limit_bytes=vmem_limit,
        ),
    )(p2, t2)

    # Per-lane validity mask (pure column property => applied after the
    # row/sublane/grid summation).  Which mask is right depends only on
    # pltpu.roll's rotation convention, probed once per process.
    lane_mod = jnp.arange(L, dtype=jnp.int32) % unit
    if _roll_matches_jnp_roll():
        mask = (lane_mod < (T - 1) * C).astype(jnp.float32)   # change flag lands on t
    else:
        mask = (lane_mod >= C).astype(jnp.float32)            # change flag lands on t+1

    # NOTE: each accumulator slot counts at most ~R/(8*num_cores) {0,1} events,
    # so f32 accumulation stays exact for any realistic video size (< 2^24).
    return jnp.sum(acc * mask[None, None, :]) / jnp.float32(B * C * H * W)


# ----------------------------------------------------------------------------
# Pure-JAX reference mirroring the PyTorch module exactly.
# ----------------------------------------------------------------------------
def temporal_consistency_score_ref(pred, target):
    B, H, W, T, C = pred.shape
    p = (pred > 0.0).astype(jnp.float32)
    matches = (p == target.astype(jnp.float32)).astype(jnp.float32)      # (B,H,W,T,C)
    diff = jnp.abs(matches[:, :, :, 1:, :] - matches[:, :, :, :-1, :])
    changes_sum = jnp.sum(diff, axis=(1, 2, 3, 4))                       # (B,)
    return jnp.mean(changes_sum) / (C * H * W)


if __name__ == "__main__":
    key = jax.random.PRNGKey(0)
    k1, k2 = jax.random.split(key)

    # small shapes consistent with the module's (b, h, w, t, c) forward convention
    B, H, W, T, C = 2, 16, 16, 8, 4
    pred = jax.random.normal(k1, (B, H, W, T, C), dtype=jnp.float32)
    # binary targets so equality against thresholded predictions is meaningful
    target = (jax.random.uniform(k2, (B, H, W, T, C)) > 0.5).astype(jnp.float32)

    res = jax.block_until_ready(temporal_consistency_score(pred, target))
    ref = temporal_consistency_score_ref(pred, target)
    assert jnp.allclose(res, ref, rtol=1e-5, atol=1e-5), (float(res), float(ref))

    # narrow-dtype path (no wrapper-side casts): bf16 predictions
    pred_bf16 = pred.astype(jnp.bfloat16)
    res16 = jax.block_until_ready(temporal_consistency_score(pred_bf16, target))
    ref16 = temporal_consistency_score_ref(pred_bf16, target)
    assert jnp.allclose(res16, ref16, rtol=1e-5, atol=1e-5), (float(res16), float(ref16))

    # int8 targets (half the HBM traffic for the target stream)
    target_i8 = target.astype(jnp.int8)
    res8 = jax.block_until_ready(temporal_consistency_score(pred, target_i8))
    assert jnp.allclose(res8, ref, rtol=1e-5, atol=1e-5), (float(res8), float(ref))

    print("KERNEL_OK")
</pallas_src>

<mosaic_0001>
module attributes {stable_mosaic.version = 11 : i64} {
  func.func @_tce_kernel(%arg0: i32, %arg1: i32, %arg2: memref<8x2048xf32, #tpu.memory_space<vmem>>, %arg3: memref<8x2048xf32, #tpu.memory_space<vmem>>, %arg4: memref<1x8x2048xf32, #tpu.memory_space<vmem>>) attributes {dimension_semantics = [#tpu.dimension_semantics<parallel>, #tpu.dimension_semantics<arbitrary>], iteration_bounds = array<i64: 1, 1>, scalar_prefetch = 0 : i64, scratch_operands = 0 : i64, tpu.core_type = #tpu.core_type<tc>, window_params = [{transform_indices = @transform_0, window_bounds = array<i64: 8, 2048>}, {transform_indices = @transform_1, window_bounds = array<i64: 8, 2048>}, {transform_indices = @transform_2, window_bounds = array<i64: 1, 8, 2048>}]} {
    %c0_i32 = arith.constant 0 : i32
    %0 = arith.cmpi eq, %arg1, %c0_i32 : i32
    %1 = arith.extui %0 : i1 to i32
    %c0_i32_0 = arith.constant 0 : i32
    %2 = arith.cmpi ne, %1, %c0_i32_0 : i32
    scf.if %2 {
      %cst_11 = arith.constant 0.000000e+00 : f32
      %22 = vector.broadcast %cst_11 : f32 to vector<1x8x2048xf32>
      %c0_12 = arith.constant 0 : index
      %c0_13 = arith.constant 0 : index
      %c0_14 = arith.constant 0 : index
      %23 = vector.load %arg4[%c0_12, %c0_13, %c0_14] : memref<1x8x2048xf32, #tpu.memory_space<vmem>>, vector<1x8x2048xf32>
      tpu.vector_store %arg4[%c0_12, %c0_13, %c0_14], %22 {strides = array<i32>} : memref<1x8x2048xf32, #tpu.memory_space<vmem>>, vector<1x8x2048xf32>,
    } else {
    }
    %c0 = arith.constant 0 : index
    %c0_1 = arith.constant 0 : index
    %3 = vector.load %arg2[%c0, %c0_1] : memref<8x2048xf32, #tpu.memory_space<vmem>>, vector<8x2048xf32>
    %cst = arith.constant 0.000000e+00 : f32
    %4 = vector.broadcast %cst : f32 to vector<8x2048xf32>
    %5 = arith.cmpf ogt, %3, %4 : vector<8x2048xf32>
    %6 = arith.extui %5 : vector<8x2048xi1> to vector<8x2048xi32>
    %7 = arith.sitofp %6 : vector<8x2048xi32> to vector<8x2048xf32>
    %c0_2 = arith.constant 0 : index
    %c0_3 = arith.constant 0 : index
    %8 = vector.load %arg3[%c0_2, %c0_3] : memref<8x2048xf32, #tpu.memory_space<vmem>>, vector<8x2048xf32>
    %9 = arith.cmpf oeq, %7, %8 : vector<8x2048xf32>
    %10 = arith.extui %9 : vector<8x2048xi1> to vector<8x2048xi32>
    %11 = arith.sitofp %10 : vector<8x2048xi32> to vector<8x2048xf32>
    %c2044_i32 = arith.constant 2044 : i32
    %12 = tpu.dynamic_rotate %11 by %c2044_i32 dim 1 : vector<8x2048xf32>, i32 -> vector<8x2048xf32>
    %13 = arith.cmpf one, %11, %12 : vector<8x2048xf32>
    %14 = arith.extui %13 : vector<8x2048xi1> to vector<8x2048xi32>
    %15 = arith.sitofp %14 : vector<8x2048xi32> to vector<8x2048xf32>
    %c0_4 = arith.constant 0 : index
    %c0_5 = arith.constant 0 : index
    %c0_6 = arith.constant 0 : index
    %16 = vector.load %arg4[%c0_4, %c0_5, %c0_6] : memref<1x8x2048xf32, #tpu.memory_space<vmem>>, vector<1x8x2048xf32>
    %17 = vector.shape_cast %15 : vector<8x2048xf32> to vector<1x8x2048xf32>
    %cst_7 = arith.constant dense<0.000000e+00> : vector<8x2048xf32>
    %18 = vector.multi_reduction <add>, %17, %cst_7 [0] : vector<1x8x2048xf32> to vector<8x2048xf32>
    %19 = vector.shape_cast %18 : vector<8x2048xf32> to vector<1x8x2048xf32>
    %20 = arith.addf %16, %19 : vector<1x8x2048xf32>
    %c0_8 = arith.constant 0 : index
    %c0_9 = arith.constant 0 : index
    %c0_10 = arith.constant 0 : index
    %21 = vector.load %arg4[%c0_8, %c0_9, %c0_10] : memref<1x8x2048xf32, #tpu.memory_space<vmem>>, vector<1x8x2048xf32>
    tpu.vector_store %arg4[%c0_8, %c0_9, %c0_10], %20 {strides = array<i32>} : memref<1x8x2048xf32, #tpu.memory_space<vmem>>, vector<1x8x2048xf32>,
    return
  }
  func.func @transform_0(%arg0: i32, %arg1: i32) -> (i32, i32) {
    %c1_i32 = arith.constant 1 : i32
    %0 = arith.muli %arg0, %c1_i32 : i32
    %1 = arith.addi %0, %arg1 : i32
    %c0_i32 = arith.constant 0 : i32
    %2 = arith.minsi %1, %c0_i32 : i32
    %c0_i32_0 = arith.constant 0 : i32
    %c0_i32_1 = arith.constant 0 : i32
    return %2, %c0_i32_0 : i32, i32
  }
  func.func @transform_1(%arg0: i32, %arg1: i32) -> (i32, i32) {
    %c1_i32 = arith.constant 1 : i32
    %0 = arith.muli %arg0, %c1_i32 : i32
    %1 = arith.addi %0, %arg1 : i32
    %c0_i32 = arith.constant 0 : i32
    %2 = arith.minsi %1, %c0_i32 : i32
    %c0_i32_0 = arith.constant 0 : i32
    %c0_i32_1 = arith.constant 0 : i32
    return %2, %c0_i32_0 : i32, i32
  }
  func.func @transform_2(%arg0: i32, %arg1: i32) -> (i32, i32, i32) {
    %c0_i32 = arith.constant 0 : i32
    %c0_i32_0 = arith.constant 0 : i32
    %c0_i32_1 = arith.constant 0 : i32
    return %arg0, %c0_i32, %c0_i32_0 : i32, i32, i32
  }
}

</mosaic_0001>

<llo_original>
// kernel: tpu_custom_call.1
$region0: #{tpu_custom_call.1}
  #allocation0 [shape = 'u32[]', space=smem, size = 0x4, offset = 0x4, fixed_abs, tag = 'smem constant byte address 0x4 - core index']
  #allocation1 [shape = 'u32[72,128]{1,0:T(1,128)}', space=vmem, size = 0x9000, scoped, tag = 'internal scratch']
  %s0 = inlined_call_operand.hbm [shape: f32[8,2048], index: 0, kind: input, shape index: {}]
  %s1 = inlined_call_operand.hbm [shape: f32[8,2048], index: 1, kind: input, shape index: {}]
  %s2 = inlined_call_operand.hbm [shape: f32[1,8,2048], index: 2, kind: output, shape index: {}]
  %s3 = sld [smem:[#allocation0]]
  $region30: #{tpu_custom_call.1} parent=0
    _
  %s5 = ssub.s32 1, %s3
  %s6 = scalar_select 0, %s5, %s3
  $region1: #{tpu_custom_call.1} parent=0
    #allocation2 [shape = 'u8[65536]{0}', space=vmem, size = 0x10000, scoped, tag = 'input window, operand 0, single buffered']
    #allocation3 [shape = 's32[1]{0}', space=sflag, size = 0x4, scoped, tag = 'scoped memory for tpu_custom_call.1']
    #allocation4 [shape = 's32[1]{0}', space=sflag, size = 0x4, scoped, tag = 'scoped memory for tpu_custom_call.1']
    #allocation5 [shape = 'u8[65536]{0}', space=vmem, size = 0x10000, scoped, tag = 'input window, operand 1, single buffered']
    #allocation6 [shape = 's32[1]{0}', space=sflag, size = 0x4, scoped, tag = 'scoped memory for tpu_custom_call.1']
    #allocation7 [shape = 'u8[65536]{0}', space=vmem, size = 0x10000, scoped, tag = 'output window, operand 0, single buffered']
    %7 = vsyncpa [#allocation3], 0
    %8 = vsyncpa [#allocation6], 0
    %9 = vsyncpa [#allocation4], 0
    // Predicated region
    $region2: #{tpu_custom_call.1} parent=1 // pred_check
      _
    $region3: #{tpu_custom_call.1} parent=1 // pred_check_branch
      %11 = sbr.rel (0) target = $region5
    $region4: #{tpu_custom_call.1} parent=1 // pred_region
      %s12 = sadd.s32 0, 0
      %p13 = scmp.lt.s32.totalorder %s12, 0
      %s14 = scalar_select %p13, %s12, 0
      %16 = vsyncadd [#allocation3], 0
      %s17 = smul.addr %s14, 16
      %s18 = smul.addr %s17, 8
      %s19 = scalar_lea.hbm %s0, %s18
      %s21 = sshll.u32 %s19, 4
      %s22 = int_to_ptr.hbm [resolvable:$true] %s21
      %s23 = sshll.u32 [#allocation2], 4
      %s24 = int_to_ptr.vmem [resolvable:$true] %s23
      %26 = dma.hbm_to_vmem [thread:$0]  %s22, 2048, %s24, [#allocation3]
    $region5: #{tpu_custom_call.1} parent=1 // pred_fallthru
      _
    // Predicated region
    $region6: #{tpu_custom_call.1} parent=1 // pred_check
      _
    $region7: #{tpu_custom_call.1} parent=1 // pred_check_branch
      %28 = sbr.rel (0) target = $region9
    $region8: #{tpu_custom_call.1} parent=1 // pred_region
      %s29 = sadd.s32 0, 0
      %p30 = scmp.lt.s32.totalorder %s29, 0
      %s31 = scalar_select %p30, %s29, 0
      %33 = vsyncadd [#allocation6], 0
      %s34 = smul.addr %s31, 16
      %s35 = smul.addr %s34, 8
      %s36 = scalar_lea.hbm %s1, %s35
      %s38 = sshll.u32 %s36, 4
      %s39 = int_to_ptr.hbm [resolvable:$true] %s38
      %s40 = sshll.u32 [#allocation5], 4
      %s41 = int_to_ptr.vmem [resolvable:$true] %s40
      %43 = dma.hbm_to_vmem [thread:$0]  %s39, 2048, %s41, [#allocation6]
    $region9: #{tpu_custom_call.1} parent=1 // pred_fallthru
      _
    // Predicated region
    $region10: #{tpu_custom_call.1} parent=1 // pred_check
      _
    $region11: #{tpu_custom_call.1} parent=1 // pred_check_branch
      %45 = sbr.rel (0) target = $region13
    $region12: #{tpu_custom_call.1} parent=1 // pred_region
      %47 = dma.done [#allocation3], 2048
    $region13: #{tpu_custom_call.1} parent=1 // pred_fallthru
      _
    // Predicated region
    $region14: #{tpu_custom_call.1} parent=1 // pred_check
      _
    $region15: #{tpu_custom_call.1} parent=1 // pred_check_branch
      %49 = sbr.rel (0) target = $region17
    $region16: #{tpu_custom_call.1} parent=1 // pred_region
      %51 = dma.done [#allocation6], 2048
    $region17: #{tpu_custom_call.1} parent=1 // pred_fallthru
      _
    %s52 = sadd.s32 0, 0
    %p53 = scmp.lt.s32.totalorder %s52, 0
    %s54 = scalar_select %p53, %s52, 0
    %s55 = sadd.s32 0, 0
    %p56 = scmp.lt.s32.totalorder %s55, 0
    %s57 = scalar_select %p56, %s55, 0
    %p58 = scmp.eq.s32.totalorder 0, 0
    // Predicated region
    $region18: #{tpu_custom_call.1} parent=1 // pred_check
      %p59 = pneg %p58
    $region19: #{tpu_custom_call.1} parent=1 // pred_check_branch
      %61 = sbr.rel (%p59) target = $region21
    $region20: #{tpu_custom_call.1} parent=1 // pred_region
      %62 = vst [vmem:[#allocation7] sm:$0xff] 0.0
      %63 = vst [vmem:[#allocation7 + $0x8] sm:$0xff] 0.0
      %64 = vst [vmem:[#allocation7 + $0x10] sm:$0xff] 0.0
      %65 = vst [vmem:[#allocation7 + $0x18] sm:$0xff] 0.0
      %66 = vst [vmem:[#allocation7 + $0x20] sm:$0xff] 0.0
      %67 = vst [vmem:[#allocation7 + $0x28] sm:$0xff] 0.0
      %68 = vst [vmem:[#allocation7 + $0x30] sm:$0xff] 0.0
      %69 = vst [vmem:[#allocation7 + $0x38] sm:$0xff] 0.0
      %70 = vst [vmem:[#allocation7 + $0x40] sm:$0xff] 0.0
      %71 = vst [vmem:[#allocation7 + $0x48] sm:$0xff] 0.0
      %72 = vst [vmem:[#allocation7 + $0x50] sm:$0xff] 0.0
      %73 = vst [vmem:[#allocation7 + $0x58] sm:$0xff] 0.0
      %74 = vst [vmem:[#allocation7 + $0x60] sm:$0xff] 0.0
      %75 = vst [vmem:[#allocation7 + $0x68] sm:$0xff] 0.0
      %76 = vst [vmem:[#allocation7 + $0x70] sm:$0xff] 0.0
      %77 = vst [vmem:[#allocation7 + $0x78] sm:$0xff] 0.0
    $region21: #{tpu_custom_call.1} parent=1 // pred_fallthru
      _
    %v78 = vld [vmem:[#allocation2] sm:$0xff]
    %v79 = vld [vmem:[#allocation2 + $0x8] sm:$0xff]
    %v80 = vld [vmem:[#allocation2 + $0x10] sm:$0xff]
    %v81 = vld [vmem:[#allocation2 + $0x18] sm:$0xff]
    %v82 = vld [vmem:[#allocation2 + $0x20] sm:$0xff]
    %v83 = vld [vmem:[#allocation2 + $0x28] sm:$0xff]
    %v84 = vld [vmem:[#allocation2 + $0x30] sm:$0xff]
    %v85 = vld [vmem:[#allocation2 + $0x38] sm:$0xff]
    %v86 = vld [vmem:[#allocation2 + $0x40] sm:$0xff]
    %v87 = vld [vmem:[#allocation2 + $0x48] sm:$0xff]
    %v88 = vld [vmem:[#allocation2 + $0x50] sm:$0xff]
    %v89 = vld [vmem:[#allocation2 + $0x58] sm:$0xff]
    %v90 = vld [vmem:[#allocation2 + $0x60] sm:$0xff]
    %v91 = vld [vmem:[#allocation2 + $0x68] sm:$0xff]
    %v92 = vld [vmem:[#allocation2 + $0x70] sm:$0xff]
    %v93 = vld [vmem:[#allocation2 + $0x78] sm:$0xff]
    %vm94 = vcmp.gt.f32.partialorder %v78, 0.0
    %vm95 = vcmp.gt.f32.partialorder %v79, 0.0
    %vm96 = vcmp.gt.f32.partialorder %v80, 0.0
    %vm97 = vcmp.gt.f32.partialorder %v81, 0.0
    %vm98 = vcmp.gt.f32.partialorder %v82, 0.0
    %vm99 = vcmp.gt.f32.partialorder %v83, 0.0
    %vm100 = vcmp.gt.f32.partialorder %v84, 0.0
    %vm101 = vcmp.gt.f32.partialorder %v85, 0.0
    %vm102 = vcmp.gt.f32.partialorder %v86, 0.0
    %vm103 = vcmp.gt.f32.partialorder %v87, 0.0
    %vm104 = vcmp.gt.f32.partialorder %v88, 0.0
    %vm105 = vcmp.gt.f32.partialorder %v89, 0.0
    %vm106 = vcmp.gt.f32.partialorder %v90, 0.0
    %vm107 = vcmp.gt.f32.partialorder %v91, 0.0
    %vm108 = vcmp.gt.f32.partialorder %v92, 0.0
    %vm109 = vcmp.gt.f32.partialorder %v93, 0.0
    %v110 = vsel %vm94, 1, 0
    %v111 = vsel %vm95, 1, 0
    %v112 = vsel %vm96, 1, 0
    %v113 = vsel %vm97, 1, 0
    %v114 = vsel %vm98, 1, 0
    %v115 = vsel %vm99, 1, 0
    %v116 = vsel %vm100, 1, 0
    %v117 = vsel %vm101, 1, 0
    %v118 = vsel %vm102, 1, 0
    %v119 = vsel %vm103, 1, 0
    %v120 = vsel %vm104, 1, 0
    %v121 = vsel %vm105, 1, 0
    %v122 = vsel %vm106, 1, 0
    %v123 = vsel %vm107, 1, 0
    %v124 = vsel %vm108, 1, 0
    %v125 = vsel %vm109, 1, 0
    %v126 = vcvt.s32.f32 %v110
    %v127 = vcvt.s32.f32 %v111
    %v128 = vcvt.s32.f32 %v112
    %v129 = vcvt.s32.f32 %v113
    %v130 = vcvt.s32.f32 %v114
    %v131 = vcvt.s32.f32 %v115
    %v132 = vcvt.s32.f32 %v116
    %v133 = vcvt.s32.f32 %v117
    %v134 = vcvt.s32.f32 %v118
    %v135 = vcvt.s32.f32 %v119
    %v136 = vcvt.s32.f32 %v120
    %v137 = vcvt.s32.f32 %v121
    %v138 = vcvt.s32.f32 %v122
    %v139 = vcvt.s32.f32 %v123
    %v140 = vcvt.s32.f32 %v124
    %v141 = vcvt.s32.f32 %v125
    %v142 = vld [vmem:[#allocation5] sm:$0xff]
    %v143 = vld [vmem:[#allocation5 + $0x8] sm:$0xff]
    %v144 = vld [vmem:[#allocation5 + $0x10] sm:$0xff]
    %v145 = vld [vmem:[#allocation5 + $0x18] sm:$0xff]
    %v146 = vld [vmem:[#allocation5 + $0x20] sm:$0xff]
    %v147 = vld [vmem:[#allocation5 + $0x28] sm:$0xff]
    %v148 = vld [vmem:[#allocation5 + $0x30] sm:$0xff]
    %v149 = vld [vmem:[#allocation5 + $0x38] sm:$0xff]
    %v150 = vld [vmem:[#allocation5 + $0x40] sm:$0xff]
    %v151 = vld [vmem:[#allocation5 + $0x48] sm:$0xff]
    %v152 = vld [vmem:[#allocation5 + $0x50] sm:$0xff]
    %v153 = vld [vmem:[#allocation5 + $0x58] sm:$0xff]
    %v154 = vld [vmem:[#allocation5 + $0x60] sm:$0xff]
    %v155 = vld [vmem:[#allocation5 + $0x68] sm:$0xff]
    %v156 = vld [vmem:[#allocation5 + $0x70] sm:$0xff]
    %v157 = vld [vmem:[#allocation5 + $0x78] sm:$0xff]
    %vm158 = vcmp.eq.f32.partialorder %v126, %v142
    %vm159 = vcmp.eq.f32.partialorder %v127, %v143
    %vm160 = vcmp.eq.f32.partialorder %v128, %v144
    %vm161 = vcmp.eq.f32.partialorder %v129, %v145
    %vm162 = vcmp.eq.f32.partialorder %v130, %v146
    %vm163 = vcmp.eq.f32.partialorder %v131, %v147
    %vm164 = vcmp.eq.f32.partialorder %v132, %v148
    %vm165 = vcmp.eq.f32.partialorder %v133, %v149
    %vm166 = vcmp.eq.f32.partialorder %v134, %v150
    %vm167 = vcmp.eq.f32.partialorder %v135, %v151
    %vm168 = vcmp.eq.f32.partialorder %v136, %v152
    %vm169 = vcmp.eq.f32.partialorder %v137, %v153
    %vm170 = vcmp.eq.f32.partialorder %v138, %v154
    %vm171 = vcmp.eq.f32.partialorder %v139, %v155
    %vm172 = vcmp.eq.f32.partialorder %v140, %v156
    %vm173 = vcmp.eq.f32.partialorder %v141, %v157
    %v174 = vsel %vm158, 1, 0
    %v175 = vsel %vm159, 1, 0
    %v176 = vsel %vm160, 1, 0
    %v177 = vsel %vm161, 1, 0
    %v178 = vsel %vm162, 1, 0
    %v179 = vsel %vm163, 1, 0
    %v180 = vsel %vm164, 1, 0
    %v181 = vsel %vm165, 1, 0
    %v182 = vsel %vm166, 1, 0
    %v183 = vsel %vm167, 1, 0
    %v184 = vsel %vm168, 1, 0
    %v185 = vsel %vm169, 1, 0
    %v186 = vsel %vm170, 1, 0
    %v187 = vsel %vm171, 1, 0
    %v188 = vsel %vm172, 1, 0
    %v189 = vsel %vm173, 1, 0
    %v190 = vcvt.s32.f32 %v174
    %v191 = vcvt.s32.f32 %v175
    %v192 = vcvt.s32.f32 %v176
    %v193 = vcvt.s32.f32 %v177
    %v194 = vcvt.s32.f32 %v178
    %v195 = vcvt.s32.f32 %v179
    %v196 = vcvt.s32.f32 %v180
    %v197 = vcvt.s32.f32 %v181
    %v198 = vcvt.s32.f32 %v182
    %v199 = vcvt.s32.f32 %v183
    %v200 = vcvt.s32.f32 %v184
    %v201 = vcvt.s32.f32 %v185
    %v202 = vcvt.s32.f32 %v186
    %v203 = vcvt.s32.f32 %v187
    %v204 = vcvt.s32.f32 %v188
    %v205 = vcvt.s32.f32 %v189
    %206 = vrot.lane.b32.xlu0 %v190, 124
    %v207 = vpop.permute.xlu0 %206
    %208 = vrot.lane.b32.xlu0 %v191, 124
    %v209 = vpop.permute.xlu0 %208
    %210 = vrot.lane.b32.xlu0 %v192, 124
    %v211 = vpop.permute.xlu0 %210
    %212 = vrot.lane.b32.xlu0 %v193, 124
    %v213 = vpop.permute.xlu0 %212
    %214 = vrot.lane.b32.xlu0 %v194, 124
    %v215 = vpop.permute.xlu0 %214
    %216 = vrot.lane.b32.xlu0 %v195, 124
    %v217 = vpop.permute.xlu0 %216
    %218 = vrot.lane.b32.xlu0 %v196, 124
    %v219 = vpop.permute.xlu0 %218
    %220 = vrot.lane.b32.xlu0 %v197, 124
    %v221 = vpop.permute.xlu0 %220
    %222 = vrot.lane.b32.xlu0 %v198, 124
    %v223 = vpop.permute.xlu0 %222
    %224 = vrot.lane.b32.xlu0 %v199, 124
    %v225 = vpop.permute.xlu0 %224
    %226 = vrot.lane.b32.xlu0 %v200, 124
    %v227 = vpop.permute.xlu0 %226
    %228 = vrot.lane.b32.xlu0 %v201, 124
    %v229 = vpop.permute.xlu0 %228
    %230 = vrot.lane.b32.xlu0 %v202, 124
    %v231 = vpop.permute.xlu0 %230
    %232 = vrot.lane.b32.xlu0 %v203, 124
    %v233 = vpop.permute.xlu0 %232
    %234 = vrot.lane.b32.xlu0 %v204, 124
    %v235 = vpop.permute.xlu0 %234
    %236 = vrot.lane.b32.xlu0 %v205, 124
    %v237 = vpop.permute.xlu0 %236
    %v238 = vlaneseq
    %v239 = vand.u32 %v238, 127
    %vm240 = vcmp.lt.s32.totalorder %v239, 124
    %v241 = vsel %vm240, %v235, %v237
    %v242 = vsel %vm240, %v233, %v235
    %v243 = vsel %vm240, %v231, %v233
    %v244 = vsel %vm240, %v229, %v231
    %v245 = vsel %vm240, %v227, %v229
    %v246 = vsel %vm240, %v225, %v227
    %v247 = vsel %vm240, %v223, %v225
    %v248 = vsel %vm240, %v221, %v223
    %v249 = vsel %vm240, %v219, %v221
    %v250 = vsel %vm240, %v217, %v219
    %v251 = vsel %vm240, %v215, %v217
    %v252 = vsel %vm240, %v213, %v215
    %v253 = vsel %vm240, %v211, %v213
    %v254 = vsel %vm240, %v209, %v211
    %v255 = vsel %vm240, %v207, %v209
    %v256 = vsel %vm240, %v237, %v207
    %vm257 = vcmp.ne.f32.partialorder %v190, %v255
    %vm258 = vcmp.ne.f32.partialorder %v191, %v254
    %vm259 = vcmp.ne.f32.partialorder %v192, %v253
    %vm260 = vcmp.ne.f32.partialorder %v193, %v252
    %vm261 = vcmp.ne.f32.partialorder %v194, %v251
    %vm262 = vcmp.ne.f32.partialorder %v195, %v250
    %vm263 = vcmp.ne.f32.partialorder %v196, %v249
    %vm264 = vcmp.ne.f32.partialorder %v197, %v248
    %vm265 = vcmp.ne.f32.partialorder %v198, %v247
    %vm266 = vcmp.ne.f32.partialorder %v199, %v246
    %vm267 = vcmp.ne.f32.partialorder %v200, %v245
    %vm268 = vcmp.ne.f32.partialorder %v201, %v244
    %vm269 = vcmp.ne.f32.partialorder %v202, %v243
    %vm270 = vcmp.ne.f32.partialorder %v203, %v242
    %vm271 = vcmp.ne.f32.partialorder %v204, %v241
    %vm272 = vcmp.ne.f32.partialorder %v205, %v256
    %v273 = vsel %vm257, 1, 0
    %v274 = vsel %vm258, 1, 0
    %v275 = vsel %vm259, 1, 0
    %v276 = vsel %vm260, 1, 0
    %v277 = vsel %vm261, 1, 0
    %v278 = vsel %vm262, 1, 0
    %v279 = vsel %vm263, 1, 0
    %v280 = vsel %vm264, 1, 0
    %v281 = vsel %vm265, 1, 0
    %v282 = vsel %vm266, 1, 0
    %v283 = vsel %vm267, 1, 0
    %v284 = vsel %vm268, 1, 0
    %v285 = vsel %vm269, 1, 0
    %v286 = vsel %vm270, 1, 0
    %v287 = vsel %vm271, 1, 0
    %v288 = vsel %vm272, 1, 0
    %v289 = vcvt.s32.f32 %v273
    %v290 = vcvt.s32.f32 %v274
    %v291 = vcvt.s32.f32 %v275
    %v292 = vcvt.s32.f32 %v276
    %v293 = vcvt.s32.f32 %v277
    %v294 = vcvt.s32.f32 %v278
    %v295 = vcvt.s32.f32 %v279
    %v296 = vcvt.s32.f32 %v280
    %v297 = vcvt.s32.f32 %v281
    %v298 = vcvt.s32.f32 %v282
    %v299 = vcvt.s32.f32 %v283
    %v300 = vcvt.s32.f32 %v284
    %v301 = vcvt.s32.f32 %v285
    %v302 = vcvt.s32.f32 %v286
    %v303 = vcvt.s32.f32 %v287
    %v304 = vcvt.s32.f32 %v288
    %v305 = vld [vmem:[#allocation7] sm:$0xff]
    %v306 = vld [vmem:[#allocation7 + $0x8] sm:$0xff]
    %v307 = vld [vmem:[#allocation7 + $0x10] sm:$0xff]
    %v308 = vld [vmem:[#allocation7 + $0x18] sm:$0xff]
    %v309 = vld [vmem:[#allocation7 + $0x20] sm:$0xff]
    %v310 = vld [vmem:[#allocation7 + $0x28] sm:$0xff]
    %v311 = vld [vmem:[#allocation7 + $0x30] sm:$0xff]
    %v312 = vld [vmem:[#allocation7 + $0x38] sm:$0xff]
    %v313 = vld [vmem:[#allocation7 + $0x40] sm:$0xff]
    %v314 = vld [vmem:[#allocation7 + $0x48] sm:$0xff]
    %v315 = vld [vmem:[#allocation7 + $0x50] sm:$0xff]
    %v316 = vld [vmem:[#allocation7 + $0x58] sm:$0xff]
    %v317 = vld [vmem:[#allocation7 + $0x60] sm:$0xff]
    %v318 = vld [vmem:[#allocation7 + $0x68] sm:$0xff]
    %v319 = vld [vmem:[#allocation7 + $0x70] sm:$0xff]
    %v320 = vld [vmem:[#allocation7 + $0x78] sm:$0xff]
    %v321 = vadd.f32 %v289, 0.0
    %v322 = vadd.f32 %v290, 0.0
    %v323 = vadd.f32 %v291, 0.0
    %v324 = vadd.f32 %v292, 0.0
    %v325 = vadd.f32 %v293, 0.0
    %v326 = vadd.f32 %v294, 0.0
    %v327 = vadd.f32 %v295, 0.0
    %v328 = vadd.f32 %v296, 0.0
    %v329 = vadd.f32 %v297, 0.0
    %v330 = vadd.f32 %v298, 0.0
    %v331 = vadd.f32 %v299, 0.0
    %v332 = vadd.f32 %v300, 0.0
    %v333 = vadd.f32 %v301, 0.0
    %v334 = vadd.f32 %v302, 0.0
    %v335 = vadd.f32 %v303, 0.0
    %v336 = vadd.f32 %v304, 0.0
    %v337 = vadd.f32 %v305, %v321
    %v338 = vadd.f32 %v306, %v322
    %v339 = vadd.f32 %v307, %v323
    %v340 = vadd.f32 %v308, %v324
    %v341 = vadd.f32 %v309, %v325
    %v342 = vadd.f32 %v310, %v326
    %v343 = vadd.f32 %v311, %v327
    %v344 = vadd.f32 %v312, %v328
    %v345 = vadd.f32 %v313, %v329
    %v346 = vadd.f32 %v314, %v330
    %v347 = vadd.f32 %v315, %v331
    %v348 = vadd.f32 %v316, %v332
    %v349 = vadd.f32 %v317, %v333
    %v350 = vadd.f32 %v318, %v334
    %v351 = vadd.f32 %v319, %v335
    %v352 = vadd.f32 %v320, %v336
    %353 = vst [vmem:[#allocation7] sm:$0xff] %v337
    %354 = vst [vmem:[#allocation7 + $0x8] sm:$0xff] %v338
    %355 = vst [vmem:[#allocation7 + $0x10] sm:$0xff] %v339
    %356 = vst [vmem:[#allocation7 + $0x18] sm:$0xff] %v340
    %357 = vst [vmem:[#allocation7 + $0x20] sm:$0xff] %v341
    %358 = vst [vmem:[#allocation7 + $0x28] sm:$0xff] %v342
    %359 = vst [vmem:[#allocation7 + $0x30] sm:$0xff] %v343
    %360 = vst [vmem:[#allocation7 + $0x38] sm:$0xff] %v344
    %361 = vst [vmem:[#allocation7 + $0x40] sm:$0xff] %v345
    %362 = vst [vmem:[#allocation7 + $0x48] sm:$0xff] %v346
    %363 = vst [vmem:[#allocation7 + $0x50] sm:$0xff] %v347
    %364 = vst [vmem:[#allocation7 + $0x58] sm:$0xff] %v348
    %365 = vst [vmem:[#allocation7 + $0x60] sm:$0xff] %v349
    %366 = vst [vmem:[#allocation7 + $0x68] sm:$0xff] %v350
    %367 = vst [vmem:[#allocation7 + $0x70] sm:$0xff] %v351
    %368 = vst [vmem:[#allocation7 + $0x78] sm:$0xff] %v352
    // Predicated region
    $region22: #{tpu_custom_call.1} parent=1 // pred_check
      _
    $region23: #{tpu_custom_call.1} parent=1 // pred_check_branch
      %370 = sbr.rel (0) target = $region25
    $region24: #{tpu_custom_call.1} parent=1 // pred_region
      %372 = vsyncadd [#allocation4], 0
      %s374 = sshll.u32 [#allocation7], 4
      %s375 = int_to_ptr.vmem [resolvable:$true] %s374
      %s376 = sshll.u32 %s2, 4
      %s377 = int_to_ptr.hbm [resolvable:$true] %s376
      %379 = dma.vmem_to_hbm [thread:$0]  %s375, 2048, %s377, [#allocation4]
    $region25: #{tpu_custom_call.1} parent=1 // pred_fallthru
      _
    // Predicated region
    $region26: #{tpu_custom_call.1} parent=1 // pred_check
      _
    $region27: #{tpu_custom_call.1} parent=1 // pred_check_branch
      %381 = sbr.rel (0) target = $region29
    $region28: #{tpu_custom_call.1} parent=1 // pred_region
      %383 = dma.done [#allocation4], 2048
    $region29: #{tpu_custom_call.1} parent=1 // pred_fallthru
      _
    %384 = vsyncpa [#allocation3], 1
    %385 = vsyncpa [#allocation6], 1
    %386 = vsyncpa [#allocation4], 1

</llo_original>
